<compile_context>
chip_gen: v7x
topology: tpu7x:2x2x1
jax: 0.10.0
libtpu: 0.0.40
codegen_flags: <defaults>
</compile_context>

<pallas_src>
import math

import jax
import jax.numpy as jnp
from jax.experimental import pallas as pl
from jax.experimental.pallas import tpu as pltpu

TM_MAX = 512      # max lane-tile (pixels per grid step); VMEM-safe on v7x too
BN_EPS = 1e-5


# ----------------------------------------------------------------------------
# Fused attention-gate kernel (channel-major / lane-dense blocks).
#   ag   : [F_g, TM] bf16   bilinearly-resized gating pixels (channels major)
#   ax   : [F_l, TM] f32    skip-connection pixels (reused for x * psi)
#   wg   : [F_i, F_g] bf16  W_g 1x1 conv weight with BN scale folded in
#   wx   : [F_i, F_l] bf16  W_x 1x1 conv weight with BN scale folded in
#   shift: [F_i, 1]  f32    combined conv-bias + BN shift of both branches
#   psiw : [F_i, 1]  f32    psi 1x1 conv weight with BN scale folded in
#   psib : [1, 1]    f32    psi conv-bias + BN shift   (SMEM scalar)
#   out  : [F_l, TM] f32    x * sigmoid(psi)
# ----------------------------------------------------------------------------
def _attention_fused_kernel(ag_ref, ax_ref, wg_ref, wx_ref, shift_ref,
                            psiw_ref, psib_ref, o_ref):
    ag = ag_ref[...]                         # [F_g, TM] bf16
    ax = ax_ref[...]                         # [F_l, TM] f32
    # Additive attention: W_g(g_up) + W_x(x)  (MXU, f32 accumulation).
    y = jnp.dot(wg_ref[...], ag, preferred_element_type=jnp.float32)
    y = y + jnp.dot(wx_ref[...], ax.astype(jnp.bfloat16),
                    preferred_element_type=jnp.float32)
    y = y + shift_ref[...]                   # [F_i, TM] + [F_i, 1]
    a = jnp.maximum(y, 0.0)                  # ReLU (f32, VPU)
    # psi 1x1 conv (Cout=1): VPU multiply + sublane (channel) reduction.
    psi_pre = jnp.sum(a * psiw_ref[...], axis=0, keepdims=True) + psib_ref[0, 0]
    # sigmoid(x) = 0.5*(tanh(x/2)+1): EUP tanh, numerically stable.
    psi = 0.5 * (jnp.tanh(0.5 * psi_pre) + 1.0)       # [1, TM]
    o_ref[...] = (ax * psi).astype(o_ref.dtype)       # sublane-broadcast gate


# ----------------------------------------------------------------------------
# Glue: bilinear resize on NCHW (matches F.interpolate(mode='bilinear',
# align_corners=False)) — plain JAX, no layout transposes.
# ----------------------------------------------------------------------------
def bilinear_resize_nchw(x, out_h, out_w):
    B, C, H, W = x.shape

    def coords(in_size, out_size):
        src = (jnp.arange(out_size, dtype=jnp.float32) + 0.5) \
              * (in_size / out_size) - 0.5
        src = jnp.maximum(src, 0.0)
        i0 = jnp.clip(jnp.floor(src).astype(jnp.int32), 0, in_size - 1)
        i1 = jnp.minimum(i0 + 1, in_size - 1)
        lam = src - i0.astype(jnp.float32)
        return i0, i1, lam

    h0, h1, lh = coords(H, out_h)
    w0, w1, lw = coords(W, out_w)
    rows = (jnp.take(x, h0, axis=2) * (1.0 - lh)[None, None, :, None]
            + jnp.take(x, h1, axis=2) * lh[None, None, :, None])
    out = (jnp.take(rows, w0, axis=3) * (1.0 - lw)[None, None, None, :]
           + jnp.take(rows, w1, axis=3) * lw[None, None, None, :])
    return out


def _pick_lane_tile(hw, batch):
    """Largest lane tile <= TM_MAX (multiple of 128 or the full extent)."""
    tm = min(TM_MAX, hw)
    if tm != hw:
        tm = max(128, (tm // 128) * 128)
    # Keep >= 2 grid steps so both v7x TensorCores get work.
    if batch * pl.cdiv(hw, tm) < 2 and hw >= 256:
        tm = max(128, ((hw // 2) // 128) * 128)
    return tm


# ----------------------------------------------------------------------------
# Attention block forward (NCHW in / NCHW out, like the PyTorch module).
# ----------------------------------------------------------------------------
def attention_block(params, g_nchw, x_nchw):
    B, F_l, H, W = x_nchw.shape
    F_g = g_nchw.shape[1]
    F_i = params["wg_b"].shape[0]
    HW = H * W

    # 1x1 conv + BN is a per-pixel affine map, so it commutes exactly with
    # bilinear interpolation: resize raw g first, conv inside the kernel.
    g_up = bilinear_resize_nchw(g_nchw, H, W)

    # Channel-major (native NCHW) — channels -> sublanes, pixels -> lanes.
    a_g = g_up.reshape(B, F_g, HW).astype(jnp.bfloat16)
    a_x = x_nchw.reshape(B, F_l, HW)                    # f32, reused for x*psi

    # Fold conv bias + BatchNorm (eval mode) into weights / shifts.
    wg_m = (params["wg_w"][:, :, 0, 0] * params["wg_s"][:, None]).astype(jnp.bfloat16)
    wx_m = (params["wx_w"][:, :, 0, 0] * params["wx_s"][:, None]).astype(jnp.bfloat16)
    shift = (params["wg_b"] * params["wg_s"] + params["wg_t"]
             + params["wx_b"] * params["wx_s"] + params["wx_t"]).reshape(F_i, 1)
    psi_w = (params["psi_w"][0, :, 0, 0] * params["psi_s"][0]).reshape(F_i, 1)
    psi_b = (params["psi_b"][0] * params["psi_s"][0] + params["psi_t"][0]).reshape(1, 1)

    tm = _pick_lane_tile(HW, B)
    grid = (B, pl.cdiv(HW, tm))

    out = pl.pallas_call(
        _attention_fused_kernel,
        out_shape=jax.ShapeDtypeStruct((B, F_l, HW), jnp.float32),
        grid=grid,
        in_specs=[
            pl.BlockSpec((None, F_g, tm), lambda b, i: (b, 0, i)),
            pl.BlockSpec((None, F_l, tm), lambda b, i: (b, 0, i)),
            pl.BlockSpec((F_i, F_g), lambda b, i: (0, 0)),
            pl.BlockSpec((F_i, F_l), lambda b, i: (0, 0)),
            pl.BlockSpec((F_i, 1), lambda b, i: (0, 0)),
            pl.BlockSpec((F_i, 1), lambda b, i: (0, 0)),
            pl.BlockSpec(memory_space=pltpu.MemorySpace.SMEM),
        ],
        out_specs=pl.BlockSpec((None, F_l, tm), lambda b, i: (b, 0, i)),
        compiler_params=pltpu.CompilerParams(
            dimension_semantics=("parallel", "parallel"),
            vmem_limit_bytes=32 * 1024 * 1024),
    )(a_g, a_x, wg_m, wx_m, shift, psi_w, psi_b)

    return out.reshape(B, F_l, H, W)


# ----------------------------------------------------------------------------
# Pure-JAX reference (un-fused, PyTorch op order: conv -> BN -> resize) used
# to validate the fusion / commute / bf16 / layout choices.
# ----------------------------------------------------------------------------
def attention_block_reference(params, g_nchw, x_nchw):
    def conv1x1_bn(z, w, b, s, t):
        y = jnp.einsum('bchw,oc->bohw', z, w[:, :, 0, 0]) + b[None, :, None, None]
        return y * s[None, :, None, None] + t[None, :, None, None]

    g1 = conv1x1_bn(g_nchw, params["wg_w"], params["wg_b"],
                    params["wg_s"], params["wg_t"])
    g1 = bilinear_resize_nchw(g1, x_nchw.shape[2], x_nchw.shape[3])
    x1 = conv1x1_bn(x_nchw, params["wx_w"], params["wx_b"],
                    params["wx_s"], params["wx_t"])
    a = jnp.maximum(g1 + x1, 0.0)
    psi_pre = conv1x1_bn(a, params["psi_w"], params["psi_b"],
                         params["psi_s"], params["psi_t"])
    psi = jax.nn.sigmoid(psi_pre)
    return x_nchw * psi


# ----------------------------------------------------------------------------
# Deterministic parameter init (PyTorch Conv2d / BatchNorm2d defaults).
# ----------------------------------------------------------------------------
def init_attention_params(key, F_g, F_l, F_i):
    k = jax.random.split(key, 6)

    def conv_p(kk, cout, cin):
        bound = 1.0 / math.sqrt(cin)            # 1x1 kernel fan_in = cin
        kw, kb = jax.random.split(kk)
        w = jax.random.uniform(kw, (cout, cin, 1, 1), jnp.float32, -bound, bound)
        b = jax.random.uniform(kb, (cout,), jnp.float32, -bound, bound)
        return w, b

    def bn_p(c):
        gamma = jnp.ones((c,), jnp.float32)
        beta = jnp.zeros((c,), jnp.float32)
        mean = jnp.zeros((c,), jnp.float32)
        var = jnp.ones((c,), jnp.float32)
        s = gamma / jnp.sqrt(var + BN_EPS)
        t = beta - mean * s
        return s, t

    wg_w, wg_b = conv_p(k[0], F_i, F_g)
    wg_s, wg_t = bn_p(F_i)
    wx_w, wx_b = conv_p(k[1], F_i, F_l)
    wx_s, wx_t = bn_p(F_i)
    psi_w, psi_b = conv_p(k[2], 1, F_i)
    psi_s, psi_t = bn_p(1)
    return dict(wg_w=wg_w, wg_b=wg_b, wg_s=wg_s, wg_t=wg_t,
                wx_w=wx_w, wx_b=wx_b, wx_s=wx_s, wx_t=wx_t,
                psi_w=psi_w, psi_b=psi_b, psi_s=psi_s, psi_t=psi_t)


if __name__ == "__main__":
    key = jax.random.PRNGKey(0)
    pkey, gkey, xkey = jax.random.split(key, 3)

    # Attention_block(F_g=32, F_l=16, F_init=16); g is the coarser gating
    # signal (8x8), x is the skip connection (16x16), as in AttUNet.
    F_g, F_l, F_i = 32, 16, 16
    B, H, W = 2, 16, 16
    Hg, Wg = 8, 8

    params = init_attention_params(pkey, F_g, F_l, F_i)
    g = jax.random.normal(gkey, (B, F_g, Hg, Wg), jnp.float32)
    x = jax.random.normal(xkey, (B, F_l, H, W), jnp.float32)

    fwd = jax.jit(attention_block)
    out = fwd(params, g, x)
    jax.block_until_ready(out)

    assert out.shape == (B, F_l, H, W), out.shape
    assert bool(jnp.all(jnp.isfinite(out)))

    ref = attention_block_reference(params, g, x)
    max_err = float(jnp.max(jnp.abs(out - ref)))
    assert max_err < 5e-2, f"max abs error vs reference: {max_err}"

    print("KERNEL_OK")
</pallas_src>

<mosaic_0001>
module attributes {stable_mosaic.version = 11 : i64} {
  func.func @_attention_fused_kernel(%arg0: i32, %arg1: i32, %arg2: memref<1x32x256xbf16, #tpu.memory_space<vmem>>, %arg3: memref<1x16x256xf32, #tpu.memory_space<vmem>>, %arg4: memref<16x32xbf16, #tpu.memory_space<vmem>>, %arg5: memref<16x16xbf16, #tpu.memory_space<vmem>>, %arg6: memref<16x1xf32, #tpu.memory_space<vmem>>, %arg7: memref<16x1xf32, #tpu.memory_space<vmem>>, %arg8: memref<1x1xf32, #tpu.memory_space<smem>>, %arg9: memref<1x16x256xf32, #tpu.memory_space<vmem>>) attributes {dimension_semantics = [#tpu.dimension_semantics<parallel>, #tpu.dimension_semantics<parallel>], iteration_bounds = array<i64: 2, 1>, scalar_prefetch = 0 : i64, scratch_operands = 0 : i64, tpu.core_type = #tpu.core_type<tc>, window_params = [{transform_indices = @transform_0, window_bounds = array<i64: 1, 32, 256>}, {transform_indices = @transform_1, window_bounds = array<i64: 1, 16, 256>}, {pipeline_mode = #tpu.pipeline_mode<synchronous>, transform_indices = @transform_2, window_bounds = array<i64: 16, 32>}, {pipeline_mode = #tpu.pipeline_mode<synchronous>, transform_indices = @transform_3, window_bounds = array<i64: 16, 16>}, {pipeline_mode = #tpu.pipeline_mode<synchronous>, transform_indices = @transform_4, window_bounds = array<i64: 16, 1>}, {pipeline_mode = #tpu.pipeline_mode<synchronous>, transform_indices = @transform_5, window_bounds = array<i64: 16, 1>}, {transform_indices = @transform_6, window_bounds = array<i64: 1, 1>}, {transform_indices = @transform_7, window_bounds = array<i64: 1, 16, 256>}]} {
    %c0 = arith.constant 0 : index
    %c0_0 = arith.constant 0 : index
    %c0_1 = arith.constant 0 : index
    %0 = vector.load %arg2[%c0, %c0_0, %c0_1] : memref<1x32x256xbf16, #tpu.memory_space<vmem>>, vector<1x32x256xbf16>
    %1 = vector.shape_cast %0 : vector<1x32x256xbf16> to vector<32x256xbf16>
    %c0_2 = arith.constant 0 : index
    %c0_3 = arith.constant 0 : index
    %c0_4 = arith.constant 0 : index
    %2 = vector.load %arg3[%c0_2, %c0_3, %c0_4] : memref<1x16x256xf32, #tpu.memory_space<vmem>>, vector<1x16x256xf32>
    %3 = vector.shape_cast %2 : vector<1x16x256xf32> to vector<16x256xf32>
    %c0_5 = arith.constant 0 : index
    %c0_6 = arith.constant 0 : index
    %4 = vector.load %arg4[%c0_5, %c0_6] : memref<16x32xbf16, #tpu.memory_space<vmem>>, vector<16x32xbf16>
    %cst = arith.constant dense<0.000000e+00> : vector<16x256xf32>
    %5 = tpu.matmul %4, %1, %cst {dimension_numbers = #tpu.dot_dimension_numbers<[1], [0], [0], [1], [0, 0, 1, 1], [], []>} : vector<16x32xbf16>, vector<32x256xbf16>, vector<16x256xf32> -> vector<16x256xf32>
    %c0_7 = arith.constant 0 : index
    %c0_8 = arith.constant 0 : index
    %6 = vector.load %arg5[%c0_7, %c0_8] : memref<16x16xbf16, #tpu.memory_space<vmem>>, vector<16x16xbf16>
    %7 = arith.truncf %3 : vector<16x256xf32> to vector<16x256xbf16>
    %cst_9 = arith.constant dense<0.000000e+00> : vector<16x256xf32>
    %8 = tpu.matmul %6, %7, %cst_9 {dimension_numbers = #tpu.dot_dimension_numbers<[1], [0], [0], [1], [0, 0, 1, 1], [], []>} : vector<16x16xbf16>, vector<16x256xbf16>, vector<16x256xf32> -> vector<16x256xf32>
    %9 = arith.addf %5, %8 : vector<16x256xf32>
    %c0_10 = arith.constant 0 : index
    %c0_11 = arith.constant 0 : index
    %10 = vector.load %arg6[%c0_10, %c0_11] : memref<16x1xf32, #tpu.memory_space<vmem>>, vector<16x1xf32>
    %11 = vector.broadcast %10 : vector<16x1xf32> to vector<16x256xf32>
    %12 = arith.addf %9, %11 : vector<16x256xf32>
    %cst_12 = arith.constant 0.000000e+00 : f32
    %13 = vector.broadcast %cst_12 : f32 to vector<16x256xf32>
    %14 = arith.maximumf %12, %13 : vector<16x256xf32>
    %c0_13 = arith.constant 0 : index
    %c0_14 = arith.constant 0 : index
    %15 = vector.load %arg7[%c0_13, %c0_14] : memref<16x1xf32, #tpu.memory_space<vmem>>, vector<16x1xf32>
    %16 = vector.broadcast %15 : vector<16x1xf32> to vector<16x256xf32>
    %17 = arith.mulf %14, %16 : vector<16x256xf32>
    %cst_15 = arith.constant dense<0.000000e+00> : vector<256xf32>
    %18 = vector.multi_reduction <add>, %17, %cst_15 [0] : vector<16x256xf32> to vector<256xf32>
    %19 = vector.shape_cast %18 : vector<256xf32> to vector<1x256xf32>
    %c0_16 = arith.constant 0 : index
    %c0_17 = arith.constant 0 : index
    %20 = memref.load %arg8[%c0_16, %c0_17] : memref<1x1xf32, #tpu.memory_space<smem>>
    %21 = vector.broadcast %20 : f32 to vector<1x256xf32>
    %22 = arith.addf %19, %21 : vector<1x256xf32>
    %cst_18 = arith.constant 5.000000e-01 : f32
    %23 = vector.broadcast %cst_18 : f32 to vector<1x256xf32>
    %24 = arith.mulf %23, %22 : vector<1x256xf32>
    %25 = math.tanh %24 : vector<1x256xf32>
    %cst_19 = arith.constant 1.000000e+00 : f32
    %26 = vector.broadcast %cst_19 : f32 to vector<1x256xf32>
    %27 = arith.addf %25, %26 : vector<1x256xf32>
    %cst_20 = arith.constant 5.000000e-01 : f32
    %28 = vector.broadcast %cst_20 : f32 to vector<1x256xf32>
    %29 = arith.mulf %28, %27 : vector<1x256xf32>
    %30 = vector.broadcast %29 : vector<1x256xf32> to vector<16x256xf32>
    %31 = arith.mulf %3, %30 : vector<16x256xf32>
    %c0_21 = arith.constant 0 : index
    %c0_22 = arith.constant 0 : index
    %c0_23 = arith.constant 0 : index
    %32 = vector.load %arg9[%c0_21, %c0_22, %c0_23] : memref<1x16x256xf32, #tpu.memory_space<vmem>>, vector<1x16x256xf32>
    %33 = vector.shape_cast %32 : vector<1x16x256xf32> to vector<16x256xf32>
    %34 = vector.shape_cast %31 : vector<16x256xf32> to vector<1x16x256xf32>
    tpu.vector_store %arg9[%c0_21, %c0_22, %c0_23], %34 {strides = array<i32>} : memref<1x16x256xf32, #tpu.memory_space<vmem>>, vector<1x16x256xf32>,
    return
  }
  func.func @transform_0(%arg0: i32, %arg1: i32) -> (i32, i32, i32) {
    %c0_i32 = arith.constant 0 : i32
    %c0_i32_0 = arith.constant 0 : i32
    return %arg0, %c0_i32, %arg1 : i32, i32, i32
  }
  func.func @transform_1(%arg0: i32, %arg1: i32) -> (i32, i32, i32) {
    %c0_i32 = arith.constant 0 : i32
    %c0_i32_0 = arith.constant 0 : i32
    return %arg0, %c0_i32, %arg1 : i32, i32, i32
  }
  func.func @transform_2(%arg0: i32, %arg1: i32) -> (i32, i32) {
    %c0_i32 = arith.constant 0 : i32
    %c0_i32_0 = arith.constant 0 : i32
    %c0_i32_1 = arith.constant 0 : i32
    return %c0_i32, %c0_i32_0 : i32, i32
  }
  func.func @transform_3(%arg0: i32, %arg1: i32) -> (i32, i32) {
    %c0_i32 = arith.constant 0 : i32
    %c0_i32_0 = arith.constant 0 : i32
    %c0_i32_1 = arith.constant 0 : i32
    return %c0_i32, %c0_i32_0 : i32, i32
  }
  func.func @transform_4(%arg0: i32, %arg1: i32) -> (i32, i32) {
    %c0_i32 = arith.constant 0 : i32
    %c0_i32_0 = arith.constant 0 : i32
    %c0_i32_1 = arith.constant 0 : i32
    return %c0_i32, %c0_i32_0 : i32, i32
  }
  func.func @transform_5(%arg0: i32, %arg1: i32) -> (i32, i32) {
    %c0_i32 = arith.constant 0 : i32
    %c0_i32_0 = arith.constant 0 : i32
    %c0_i32_1 = arith.constant 0 : i32
    return %c0_i32, %c0_i32_0 : i32, i32
  }
  func.func @transform_6(%arg0: i32, %arg1: i32) -> (i32, i32) {
    %c0_i32 = arith.constant 0 : i32
    %c0_i32_0 = arith.constant 0 : i32
    %c0_i32_1 = arith.constant 0 : i32
    return %c0_i32, %c0_i32_0 : i32, i32
  }
  func.func @transform_7(%arg0: i32, %arg1: i32) -> (i32, i32, i32) {
    %c0_i32 = arith.constant 0 : i32
    %c0_i32_0 = arith.constant 0 : i32
    return %arg0, %c0_i32, %arg1 : i32, i32, i32
  }
}

</mosaic_0001>

<llo_original>
// kernel: attention_block.1
$region0: #{attention_block.1}
  #allocation0 [shape = 'u32[]', space=smem, size = 0x4, offset = 0x4, fixed_abs, tag = 'smem constant byte address 0x4 - core index']
  #allocation1 [shape = 'u32[144,128]{1,0:T(1,128)}', space=vmem, size = 0x12000, scoped, tag = 'internal scratch']
  #allocation2 [shape = 'f32[1,1]{1,0:T(1,128)S(6)}', space=smem, size = 0x200, scoped, tag = 'scoped memory for attention_block.1']
  %s0 = inlined_call_operand.vmem [shape: bf16[2,32,256], index: 0, kind: input, shape index: {}]
  %s1 = inlined_call_operand.vmem [shape: f32[2,16,256], index: 1, kind: input, shape index: {}]
  %s2 = inlined_call_operand.vmem [shape: bf16[16,32], index: 2, kind: input, shape index: {}]
  %s3 = inlined_call_operand.vmem [shape: bf16[16,16], index: 3, kind: input, shape index: {}]
  %s4 = inlined_call_operand.vmem [shape: f32[16,1], index: 4, kind: input, shape index: {}]
  %s5 = inlined_call_operand.vmem [shape: f32[16,1], index: 5, kind: input, shape index: {}]
  %s6 = inlined_call_operand.<no memory space> [shape: f32[1,1], index: 6, kind: input, shape index: {}]
  %s7 = inlined_call_operand.vmem [shape: f32[2,16,256], index: 7, kind: output, shape index: {}]
  %s8 = sld [smem:[#allocation0]]
  $region61: #{attention_block.1} parent=0
    _
  %s10 = ssub.s32 1, %s8
  %s11 = scalar_select 0, %s10, %s8
  %12 = sst [smem:[#allocation2]] %s6
  loop: start=0, step=1, limit=4
  $region2: #{attention_block.1} parent=0 // loop_pre_header
    _
  $region3: #{attention_block.1} parent=0 // loop_header
    %s14 = sphi 0, %s18
    %p15 = scmp.ge.s32.totalorder %s14, 4
    %s21 = sphi 0, %s33
    %s22 = sphi 0, %s29
    %s23 = sphi 0, %s21
    %s24 = sphi 0, %s22
    %s25 = sphi 0, %s23
    %s26 = sphi 0, %s24
    %s38 = sphi 0, %s40
    %s41 = sphi 0, %s38
    %s42 = sphi 0, %s41
    %s58 = sphi 0, %s42
    %s66 = sphi 0, %s68
    %s69 = sphi 0, %s66
    %s70 = sphi 0, %s69
    %s86 = sphi 0, %s70
    %s90 = sphi 0, %s90
    %s92 = sphi 0, %s90
    %s93 = sphi 0, %s92
    %s107 = sphi 0, %s93
    %s111 = sphi 0, %s111
    %s113 = sphi 0, %s111
    %s114 = sphi 0, %s113
    %s128 = sphi 0, %s114
    %s132 = sphi 0, %s132
    %s134 = sphi 0, %s132
    %s135 = sphi 0, %s134
    %s149 = sphi 0, %s135
    %s153 = sphi 0, %s153
    %s155 = sphi 0, %s153
    %s156 = sphi 0, %s155
    %s170 = sphi 0, %s156
    %s174 = sphi 0, %s174
    %s176 = sphi 0, %s174
    %s177 = sphi 0, %s176
    %s191 = sphi 0, %s177
    %s199 = sphi 0, %s201
    %s202 = sphi 0, %s199
    %s203 = sphi 0, %s202
    %s219 = sphi 0, %s203
  $region4: #{attention_block.1} parent=0 // loop_header_branch
    %17 = sbr.rel (%p15) target = $region8
  $region5: #{attention_block.1} parent=0 // loop_body
    %s19 = ssub.s32 %s14, 1
    %s20 = ssub.s32 %s14, 2
    %s27 = sadd.s32 1, %s22
    %p28 = scmp.ge.s32.totalorder %s27, 1
    %s29 = scalar_select %p28, 0, %s27
    %s30 = sadd.s32 1, %s21
    %s31 = scalar_select %p28, %s30, %s21
    %p32 = scmp.ge.s32.totalorder %s31, 2
    %s33 = scalar_select %p32, 0, %s31
    %s34 = ssub.s32 %s21, %s33
    %s35 = ssub.s32 %s22, %s29
    %s36 = sor.u32 %s34, %s35
    %p37 = scmp.eq.s32.totalorder %s36, 0
    %s39 = sadd.s32 %s38, 1
    %s40 = scalar_select %p37, %s38, %s39
    %p43 = pneg %p37
    %p44 = scmp.eq.s32.totalorder %s14, 1
    %p45 = por %p43, %p44
    %p46 = scmp.ne.s32.totalorder %s38, %s41
    %p47 = scmp.eq.s32.totalorder %s14, 0
    %p48 = por %p46, %p47
    %p49 = scmp.ne.s32.totalorder %s38, %s41
    %p50 = scmp.eq.s32.totalorder %s19, 1
    %p51 = por %p49, %p50
    %p52 = scmp.ne.s32.totalorder %s41, %s42
    %p53 = scmp.eq.s32.totalorder %s19, 0
    %p54 = por %p52, %p53
    %p55 = scmp.ne.s32.totalorder %s41, %s42
    %p56 = scmp.eq.s32.totalorder %s20, 1
    %p57 = por %p55, %p56
    %p59 = scmp.ne.s32.totalorder %s42, %s58
    %p60 = scmp.eq.s32.totalorder %s20, 0
    %p61 = por %p59, %p60
    %s62 = ssub.s32 %s21, %s33
    %s63 = ssub.s32 %s22, %s29
    %s64 = sor.u32 %s62, %s63
    %p65 = scmp.eq.s32.totalorder %s64, 0
    %s67 = sadd.s32 %s66, 1
    %s68 = scalar_select %p65, %s66, %s67
    %p71 = pneg %p65
    %p72 = scmp.eq.s32.totalorder %s14, 1
    %p73 = por %p71, %p72
    %p74 = scmp.ne.s32.totalorder %s66, %s69
    %p75 = scmp.eq.s32.totalorder %s14, 0
    %p76 = por %p74, %p75
    %p77 = scmp.ne.s32.totalorder %s66, %s69
    %p78 = scmp.eq.s32.totalorder %s19, 1
    %p79 = por %p77, %p78
    %p80 = scmp.ne.s32.totalorder %s69, %s70
    %p81 = scmp.eq.s32.totalorder %s19, 0
    %p82 = por %p80, %p81
    %p83 = scmp.ne.s32.totalorder %s69, %s70
    %p84 = scmp.eq.s32.totalorder %s20, 1
    %p85 = por %p83, %p84
    %p87 = scmp.ne.s32.totalorder %s70, %s86
    %p88 = scmp.eq.s32.totalorder %s20, 0
    %p89 = por %p87, %p88
    %s91 = sadd.s32 %s90, 1
    %p94 = scmp.eq.s32.totalorder %s14, 1
    %p95 = scmp.ne.s32.totalorder %s90, %s92
    %p96 = scmp.eq.s32.totalorder %s14, 0
    %p97 = por %p95, %p96
    %p98 = scmp.ne.s32.totalorder %s90, %s92
    %p99 = scmp.eq.s32.totalorder %s19, 1
    %p100 = por %p98, %p99
    %p101 = scmp.ne.s32.totalorder %s92, %s93
    %p102 = scmp.eq.s32.totalorder %s19, 0
    %p103 = por %p101, %p102
    %p104 = scmp.ne.s32.totalorder %s92, %s93
    %p105 = scmp.eq.s32.totalorder %s20, 1
    %p106 = por %p104, %p105
    %p108 = scmp.ne.s32.totalorder %s93, %s107
    %p109 = scmp.eq.s32.totalorder %s20, 0
    %p110 = por %p108, %p109
    %s112 = sadd.s32 %s111, 1
    %p115 = scmp.eq.s32.totalorder %s14, 1
    %p116 = scmp.ne.s32.totalorder %s111, %s113
    %p117 = scmp.eq.s32.totalorder %s14, 0
    %p118 = por %p116, %p117
    %p119 = scmp.ne.s32.totalorder %s111, %s113
    %p120 = scmp.eq.s32.totalorder %s19, 1
    %p121 = por %p119, %p120
    %p122 = scmp.ne.s32.totalorder %s113, %s114
    %p123 = scmp.eq.s32.totalorder %s19, 0
    %p124 = por %p122, %p123
    %p125 = scmp.ne.s32.totalorder %s113, %s114
    %p126 = scmp.eq.s32.totalorder %s20, 1
    %p127 = por %p125, %p126
    %p129 = scmp.ne.s32.totalorder %s114, %s128
    %p130 = scmp.eq.s32.totalorder %s20, 0
    %p131 = por %p129, %p130
    %s133 = sadd.s32 %s132, 1
    %p136 = scmp.eq.s32.totalorder %s14, 1
    %p137 = scmp.ne.s32.totalorder %s132, %s134
    %p138 = scmp.eq.s32.totalorder %s14, 0
    %p139 = por %p137, %p138
    %p140 = scmp.ne.s32.totalorder %s132, %s134
    %p141 = scmp.eq.s32.totalorder %s19, 1
    %p142 = por %p140, %p141
    %p143 = scmp.ne.s32.totalorder %s134, %s135
    %p144 = scmp.eq.s32.totalorder %s19, 0
    %p145 = por %p143, %p144
    %p146 = scmp.ne.s32.totalorder %s134, %s135
    %p147 = scmp.eq.s32.totalorder %s20, 1
    %p148 = por %p146, %p147
    %p150 = scmp.ne.s32.totalorder %s135, %s149
    %p151 = scmp.eq.s32.totalorder %s20, 0
    %p152 = por %p150, %p151
    %s154 = sadd.s32 %s153, 1
    %p157 = scmp.eq.s32.totalorder %s14, 1
    %p158 = scmp.ne.s32.totalorder %s153, %s155
    %p159 = scmp.eq.s32.totalorder %s14, 0
    %p160 = por %p158, %p159
    %p161 = scmp.ne.s32.totalorder %s153, %s155
    %p162 = scmp.eq.s32.totalorder %s19, 1
    %p163 = por %p161, %p162
    %p164 = scmp.ne.s32.totalorder %s155, %s156
    %p165 = scmp.eq.s32.totalorder %s19, 0
    %p166 = por %p164, %p165
    %p167 = scmp.ne.s32.totalorder %s155, %s156
    %p168 = scmp.eq.s32.totalorder %s20, 1
    %p169 = por %p167, %p168
    %p171 = scmp.ne.s32.totalorder %s156, %s170
    %p172 = scmp.eq.s32.totalorder %s20, 0
    %p173 = por %p171, %p172
    %s175 = sadd.s32 %s174, 1
    %p178 = scmp.eq.s32.totalorder %s14, 1
    %p179 = scmp.ne.s32.totalorder %s174, %s176
    %p180 = scmp.eq.s32.totalorder %s14, 0
    %p181 = por %p179, %p180
    %p182 = scmp.ne.s32.totalorder %s174, %s176
    %p183 = scmp.eq.s32.totalorder %s19, 1
    %p184 = por %p182, %p183
    %p185 = scmp.ne.s32.totalorder %s176, %s177
    %p186 = scmp.eq.s32.totalorder %s19, 0
    %p187 = por %p185, %p186
    %p188 = scmp.ne.s32.totalorder %s176, %s177
    %p189 = scmp.eq.s32.totalorder %s20, 1
    %p190 = por %p188, %p189
    %p192 = scmp.ne.s32.totalorder %s177, %s191
    %p193 = scmp.eq.s32.totalorder %s20, 0
    %p194 = por %p192, %p193
    %s195 = ssub.s32 %s21, %s33
    %s196 = ssub.s32 %s22, %s29
    %s197 = sor.u32 %s195, %s196
    %p198 = scmp.eq.s32.totalorder %s197, 0
    %s200 = sadd.s32 %s199, 1
    %s201 = scalar_select %p198, %s199, %s200
    %p204 = pneg %p198
    %p205 = scmp.eq.s32.totalorder %s14, 1
    %p206 = por %p204, %p205
    %p207 = scmp.ne.s32.totalorder %s199, %s202
    %p208 = scmp.eq.s32.totalorder %s14, 0
    %p209 = por %p207, %p208
    %p210 = scmp.ne.s32.totalorder %s199, %s202
    %p211 = scmp.eq.s32.totalorder %s19, 1
    %p212 = por %p210, %p211
    %p213 = scmp.ne.s32.totalorder %s202, %s203
    %p214 = scmp.eq.s32.totalorder %s19, 0
    %p215 = por %p213, %p214
    %p216 = scmp.ne.s32.totalorder %s202, %s203
    %p217 = scmp.eq.s32.totalorder %s20, 1
    %p218 = por %p216, %p217
    %p220 = scmp.ne.s32.totalorder %s203, %s219
    %p221 = scmp.eq.s32.totalorder %s20, 0
    %p222 = por %p220, %p221
    %p223 = scmp.le.s32.totalorder 1, %s14
    %p224 = scmp.lt.s32.totalorder %s14, 3
    %p225 = pnand %p223, %p224
    %p226 = pneg %p225
    // Predicated region
    $region9: #{attention_block.1} parent=5 // pred_check
      _
    $region10: #{attention_block.1} parent=5 // pred_check_branch
      %228 = sbr.rel (%p225) target = $region12
    $region11: #{attention_block.1} parent=5 // pred_region
      %s229 = ssub.s32 %s14, 1
      // Predicated region
      $region13: #{attention_block.1} parent=11 // pred_check
        %p230 = pneg %p103
      $region14: #{attention_block.1} parent=11 // pred_check_branch
        %232 = sbr.rel (%p230) target = $region16
      $region15: #{attention_block.1} parent=11 // pred_region
        _
      $region16: #{attention_block.1} parent=11 // pred_fallthru
        _
      // Predicated region
      $region17: #{attention_block.1} parent=11 // pred_check
        %p233 = pneg %p124
      $region18: #{attention_block.1} parent=11 // pred_check_branch
        %235 = sbr.rel (%p233) target = $region20
      $region19: #{attention_block.1} parent=11 // pred_region
        _
      $region20: #{attention_block.1} parent=11 // pred_fallthru
        _
      // Predicated region
      $region21: #{attention_block.1} parent=11 // pred_check
        %p236 = pneg %p145
      $region22: #{attention_block.1} parent=11 // pred_check_branch
        %238 = sbr.rel (%p236) target = $region24
      $region23: #{attention_block.1} parent=11 // pred_region
        _
      $region24: #{attention_block.1} parent=11 // pred_fallthru
        _
      // Predicated region
      $region25: #{attention_block.1} parent=11 // pred_check
        %p239 = pneg %p166
      $region26: #{attention_block.1} parent=11 // pred_check_branch
        %241 = sbr.rel (%p239) target = $region28
      $region27: #{attention_block.1} parent=11 // pred_region
        _
      $region28: #{attention_block.1} parent=11 // pred_fallthru
        _
      // Predicated region
      $region29: #{attention_block.1} parent=11 // pred_check
        %p242 = pneg %p187
      $region30: #{attention_block.1} parent=11 // pred_check_branch
        %244 = sbr.rel (%p242) target = $region32
      $region31: #{attention_block.1} parent=11 // pred_region
        _
      $region32: #{attention_block.1} parent=11 // pred_fallthru
        _
    $region12: #{attention_block.1} parent=5 // pred_fallthru
      _
    %p245 = scmp.lt.s32.totalorder %s14, 2
    // Predicated region
    $region33: #{attention_block.1} parent=5 // pred_check
      %p246 = pneg %p245
    $region34: #{attention_block.1} parent=5 // pred_check_branch
      %248 = sbr.rel (%p246) target = $region36
    $region35: #{attention_block.1} parent=5 // pred_region
      // Predicated region
      $region37: #{attention_block.1} parent=35 // pred_check
        %p249 = pneg %p48
      $region38: #{attention_block.1} parent=35 // pred_check_branch
        %251 = sbr.rel (%p249) target = $region40
      $region39: #{attention_block.1} parent=35 // pred_region
        %s252 = smul.u32 2, %s22
        %p253 = scmp.lt.s32.totalorder %s21, 1
        %s254 = scalar_select %p253, %s21, 1
        %p255 = scmp.lt.s32.totalorder %s252, 1
        %s256 = scalar_select %p255, %s252, 1
        %s257 = smul.addr %s254, 8
        %s258 = sadd.s32 %s256, %s257
        %s259 = smul.addr %s258, 4
        %s260 = scalar_lea.vmem %s0, %s259
        %s261 = smul.u32 2, %s22
      $region40: #{attention_block.1} parent=35 // pred_fallthru
        _
      // Predicated region
      $region41: #{attention_block.1} parent=35 // pred_check
        %p262 = pneg %p76
      $region42: #{attention_block.1} parent=35 // pred_check_branch
        %264 = sbr.rel (%p262) target = $region44
      $region43: #{attention_block.1} parent=35 // pred_region
        %s265 = smul.u32 2, %s22
        %p266 = scmp.lt.s32.totalorder %s21, 1
        %s267 = scalar_select %p266, %s21, 1
        %p268 = scmp.lt.s32.totalorder %s265, 1
        %s269 = scalar_select %p268, %s265, 1
        %s270 = smul.addr %s267, 4
        %s271 = sadd.s32 %s269, %s270
        %s272 = smul.addr %s271, 8
        %s273 = scalar_lea.vmem %s1, %s272
        %s274 = smul.u32 2, %s22
      $region44: #{attention_block.1} parent=35 // pred_fallthru
        _
    $region36: #{attention_block.1} parent=5 // pred_fallthru
      _
    %p275 = scmp.le.s32.totalorder 1, %s14
    %p276 = scmp.lt.s32.totalorder %s14, 3
    %p277 = pnand %p275, %p276
    %p278 = pneg %p277
    // Predicated region
    $region45: #{attention_block.1} parent=5 // pred_check
      _
    $region46: #{attention_block.1} parent=5 // pred_check_branch
      %280 = sbr.rel (%p277) target = $region48
    $region47: #{attention_block.1} parent=5 // pred_region
      %s281 = ssub.s32 %s14, 1
      %s282 = smul.u32 2, %s24
      %p283 = scmp.lt.s32.totalorder %s23, 1
      %s284 = scalar_select %p283, %s23, 1
      %p285 = scmp.lt.s32.totalorder %s282, 1
      %s286 = scalar_select %p285, %s282, 1
      %s287 = smul.addr %s284, 8
      %s288 = sadd.s32 %s286, %s287
      %s289 = smul.addr %s288, 4
      %s290 = scalar_lea.vmem %s0, %s289
      %p291 = pneg %p54
      %p292 = pneg %p51
      %s293 = smul.u32 2, %s24
      %p294 = scmp.lt.s32.totalorder %s23, 1
      %s295 = scalar_select %p294, %s23, 1
      %p296 = scmp.lt.s32.totalorder %s293, 1
      %s297 = scalar_select %p296, %s293, 1
      %s298 = smul.addr %s295, 4
      %s299 = sadd.s32 %s297, %s298
      %s300 = smul.addr %s299, 8
      %s301 = scalar_lea.vmem %s1, %s300
      %p302 = pneg %p82
      %p303 = pneg %p79
      %p304 = pneg %p103
      %p305 = pneg %p100
      %p306 = pneg %p124
      %p307 = pneg %p121
      %p308 = pneg %p145
      %p309 = pneg %p142
      %p310 = pneg %p166
      %p311 = pneg %p163
      %p312 = pneg %p187
      %p313 = pneg %p184
      %p314 = pneg %p215
      %p315 = pneg %p212
      %s316 = smul.u32 2, %s24
      %p317 = scmp.lt.s32.totalorder %s23, 1
      %s318 = scalar_select %p317, %s23, 1
      %p319 = scmp.lt.s32.totalorder %s316, 1
      %s320 = scalar_select %p319, %s316, 1
      %s321 = smul.addr %s318, 4
      %s322 = sadd.s32 %s320, %s321
      %s323 = smul.addr %s322, 8
      %s324 = scalar_lea.vmem %s7, %s323
      %s325 = smul.u32 2, %s24
      %p326 = scmp.lt.s32.totalorder %s23, 1
      %s327 = scalar_select %p326, %s23, 1
      %p328 = scmp.lt.s32.totalorder %s325, 1
      %s329 = scalar_select %p328, %s325, 1
      %s330 = smul.addr %s327, 8
      %s331 = sadd.s32 %s329, %s330
      %s332 = smul.addr %s331, 4
      %s333 = scalar_lea.vmem %s0, %s332
      %s334 = smul.u32 2, %s24
      %s335 = smul.u32 2, %s24
      %p336 = scmp.lt.s32.totalorder %s23, 1
      %s337 = scalar_select %p336, %s23, 1
      %p338 = scmp.lt.s32.totalorder %s335, 1
      %s339 = scalar_select %p338, %s335, 1
      %s340 = smul.addr %s337, 4
      %s341 = sadd.s32 %s339, %s340
      %s342 = smul.addr %s341, 8
      %s343 = scalar_lea.vmem %s1, %s342
      %s344 = smul.u32 2, %s24
      %s345 = smul.u32 2, %s24
      %p346 = scmp.lt.s32.totalorder %s23, 1
      %s347 = scalar_select %p346, %s23, 1
      %p348 = scmp.lt.s32.totalorder %s345, 1
      %s349 = scalar_select %p348, %s345, 1
      %s350 = smul.addr %s347, 4
      %s351 = sadd.s32 %s349, %s350
      %s352 = smul.addr %s351, 8
      %s353 = scalar_lea.vmem %s7, %s352
      %s354 = smul.u32 2, %s24
      %v356 = vld [vmem:[%s333] sm:$0xff]
      %v357 = vld [vmem:[%s333 + $0x8] sm:$0xff]
      %v358 = vld [vmem:[%s333 + $0x10] sm:$0xff]
      %v359 = vld [vmem:[%s333 + $0x18] sm:$0xff]
      %v360 = vld [vmem:[%s343] sm:$0xff]
      %v361 = vld [vmem:[%s343 + $0x8] sm:$0xff]
      %v362 = vld [vmem:[%s343 + $0x10] sm:$0xff]
      %v363 = vld [vmem:[%s343 + $0x18] sm:$0xff]
      %v364 = vld [vmem:[%s2] sm:$0xf]
      %v365 = vld [vmem:[%s2 + $0x4] sm:$0xf]
      %v366 = vld [vmem:[%s3] sm:$0xf]
      %v367 = vld [vmem:[%s3 + $0x4] sm:$0xf]
      %v368 = vpack.c.bf16 %v362, %v360
      %v369 = vpack.c.bf16 %v363, %v361
      %v372 = vunpack.c.l.b16 %v366
      %v373 = vunpack.c.l.b16 %v367
      %v374 = vpack.c.b16 %v373, %v372
      %vm375 = vcmask 130048
      %v377 = vsel %vm375, %v374, 0
      %379 = vmatprep.subr.bf16.mxu0 %v369
      %380 = vmatpush1.bf16.msra.mxu0 %v368
      %381 = vmatprep.subr.bf16.mxu0 0
      %382 = vmatpush1.bf16.msra.mxu0 0
      %383 = vmatprep.subr.bf16.mxu0 0
      %384 = vmatpush1.bf16.msra.mxu0 0
      %385 = vmatprep.subr.bf16.mxu0 0
      %386 = vmatpush1.bf16.msra.mxu0 0
      %387 = vmatprep.subr.bf16.mxu0 0
      %388 = vmatpush1.bf16.msra.mxu0 0
      %389 = vmatprep.subr.bf16.mxu0 0
      %390 = vmatpush1.bf16.msra.mxu0 0
      %391 = vmatprep.subr.bf16.mxu0 0
      %392 = vmatpush1.bf16.msra.mxu0 0
      %393 = vmatprep.subr.bf16.mxu0 0
      %394 = vmatpush1.bf16.msra.mxu0 0
      %395 = vmatprep.subr.bf16.mxu0 0
      %396 = vmatpush1.bf16.msra.mxu0 0
      %397 = vmatprep.subr.bf16.mxu0 0
      %398 = vmatpush1.bf16.msra.mxu0 0
      %399 = vmatprep.subr.bf16.mxu0 0
      %400 = vmatpush1.bf16.msra.mxu0 0
      %401 = vmatprep.subr.bf16.mxu0 0
      %402 = vmatpush1.bf16.msra.mxu0 0
      %403 = vmatprep.subr.bf16.mxu0 0
      %404 = vmatpush1.bf16.msra.mxu0 0
      %405 = vmatprep.subr.bf16.mxu0 0
      %406 = vmatpush1.bf16.msra.mxu0 0
      %407 = vmatprep.subr.bf16.mxu0 0
      %408 = vmatpush1.bf16.msra.mxu0 0
      %409 = vmatprep.subr.bf16.mxu0 0
      %410 = vmatpush1.bf16.msra.mxu0 0
      %411 = vmatprep.mubr.bf16.mxu0 0
      %412 = vmatmul.mubr.bf16.gmra.mrb[0].mxu0 %v377
      %v413 = vpop.f32.mrb[0].mxu0
      %v414 = vadd.f32 0.0, %v413
      %v415 = vpop.f32.mrb[0].mxu0
      %v416 = vadd.f32 0.0, %v415
      %v417 = vpop.f32.mrb[0].mxu0
      %v418 = vadd.f32 0.0, %v417
      %v419 = vpop.f32.mrb[0].mxu0
      %v420 = vadd.f32 0.0, %v419
      %421 = vdwg.mxu0
      %v424 = vunpack.c.l.b16 %v364
      %v425 = vunpack.c.l.b16 %v365
      %v426 = vpack.c.b16 %v425, %v424
      %v431 = vunpack.c.l.b16 %v356
      %v432 = vunpack.c.h.b16 %v356
      %v433 = vunpack.c.l.b16 %v357
      %v434 = vunpack.c.h.b16 %v357
      %v435 = vunpack.c.l.b16 %v358
      %v436 = vunpack.c.h.b16 %v358
      %v437 = vunpack.c.l.b16 %v359
      %v438 = vunpack.c.h.b16 %v359
      %v439 = vpack.c.b16 %v433, %v431
      %v440 = vpack.c.b16 %v434, %v432
      %v441 = vpack.c.b16 %v437, %v435
      %v442 = vpack.c.b16 %v438, %v436
      %vm447 = vcmask 261120
      %v449 = vsel %vm447, %v426, 0
      %451 = vmatprep.subr.bf16.mxu0 %v440
      %452 = vmatpush1.bf16.msra.mxu0 %v439
      %453 = vmatprep.subr.bf16.mxu0 %v442
      %454 = vmatpush1.bf16.msra.mxu0 %v441
      %455 = vmatprep.subr.bf16.mxu0 0
      %456 = vmatpush1.bf16.msra.mxu0 0
      %457 = vmatprep.subr.bf16.mxu0 0
      %458 = vmatpush1.bf16.msra.mxu0 0
      %459 = vmatprep.subr.bf16.mxu0 0
      %460 = vmatpush1.bf16.msra.mxu0 0
      %461 = vmatprep.subr.bf16.mxu0 0
      %462 = vmatpush1.bf16.msra.mxu0 0
      %463 = vmatprep.subr.bf16.mxu0 0
      %464 = vmatpush1.bf16.msra.mxu0 0
      %465 = vmatprep.subr.bf16.mxu0 0
      %466 = vmatpush1.bf16.msra.mxu0 0
      %467 = vmatprep.subr.bf16.mxu0 0
      %468 = vmatpush1.bf16.msra.mxu0 0
      %469 = vmatprep.subr.bf16.mxu0 0
      %470 = vmatpush1.bf16.msra.mxu0 0
      %471 = vmatprep.subr.bf16.mxu0 0
      %472 = vmatpush1.bf16.msra.mxu0 0
      %473 = vmatprep.subr.bf16.mxu0 0
      %474 = vmatpush1.bf16.msra.mxu0 0
      %475 = vmatprep.subr.bf16.mxu0 0
      %476 = vmatpush1.bf16.msra.mxu0 0
      %477 = vmatprep.subr.bf16.mxu0 0
      %478 = vmatpush1.bf16.msra.mxu0 0
      %479 = vmatprep.subr.bf16.mxu0 0
      %480 = vmatpush1.bf16.msra.mxu0 0
      %481 = vmatprep.subr.bf16.mxu0 0
      %482 = vmatpush1.bf16.msra.mxu0 0
      %483 = vmatprep.mubr.bf16.mxu0 0
      %484 = vmatmul.mubr.bf16.gmra.mrb[0].mxu0 %v449
      %v485 = vpop.f32.mrb[0].mxu0
      %v486 = vadd.f32 %v414, %v485
      %v487 = vpop.f32.mrb[0].mxu0
      %v488 = vadd.f32 %v416, %v487
      %v489 = vpop.f32.mrb[0].mxu0
      %v490 = vadd.f32 %v418, %v489
      %v491 = vpop.f32.mrb[0].mxu0
      %v492 = vadd.f32 %v420, %v491
      %493 = vdwg.mxu0
      %v494 = vld [vmem:[%s4] sm:$0xff]
      %v495 = vld [vmem:[%s4 + $0x8] sm:$0xff]
      %497 = vset.pattern.permute.xlu0 0
      %498 = vperm.xlu0 %497, %v494
      %v499 = vpop.permute.xlu0 %498
      %502 = vset.pattern.permute.xlu0 0
      %503 = vperm.xlu0 %502, %v495
      %v504 = vpop.permute.xlu0 %503
      %v506 = vadd.f32 %v486, %v499
      %v507 = vadd.f32 %v488, %v499
      %v508 = vadd.f32 %v490, %v504
      %v509 = vadd.f32 %v492, %v504
      %v510 = vmax.f32 %v506, 0.0
      %v511 = vmax.f32 %v507, 0.0
      %v512 = vmax.f32 %v508, 0.0
      %v513 = vmax.f32 %v509, 0.0
      %v514 = vld [vmem:[%s5] sm:$0xff]
      %v515 = vld [vmem:[%s5 + $0x8] sm:$0xff]
      %517 = vset.pattern.permute.xlu0 0
      %518 = vperm.xlu0 %517, %v514
      %v519 = vpop.permute.xlu0 %518
      %522 = vset.pattern.permute.xlu0 0
      %523 = vperm.xlu0 %522, %v515
      %v524 = vpop.permute.xlu0 %523
      %v526 = vmul.f32 %v510, %v519
      %v527 = vmul.f32 %v511, %v519
      %v528 = vmul.f32 %v512, %v524
      %v529 = vmul.f32 %v513, %v524
      %v530 = vadd.f32 %v526, %v528
      %v531 = vrot.slane %v530, 4
      %v532 = vadd.f32 %v530, %v531
      %v533 = vrot.slane %v532, 2
      %v534 = vadd.f32 %v532, %v533
      %v535 = vrot.slane %v534, 1
      %v536 = vadd.f32 %v534, %v535
      %v537 = vadd.f32 %v527, %v529
      %v538 = vrot.slane %v537, 4
      %v539 = vadd.f32 %v537, %v538
      %v540 = vrot.slane %v539, 2
      %v541 = vadd.f32 %v539, %v540
      %v542 = vrot.slane %v541, 1
      %v543 = vadd.f32 %v541, %v542
      %s544 = sld [smem:[#allocation2]]
      %v545 = vstv %s544
      %v546 = vadd.f32 %v536, %v545
      %v547 = vadd.f32 %v543, %v545
      %v548 = vmul.f32 %v546, 0.5
      %v549 = vmul.f32 %v547, 0.5
      %v550 = vtanh.pop %v548
      %v551 = vtanh.pop %v549
      %v552 = vadd.f32 %v550, 1.0
      %v553 = vadd.f32 %v551, 1.0
      %v554 = vmul.f32 %v552, 0.5
      %v555 = vmul.f32 %v553, 0.5
      %v556 = vmul.f32 %v360, %v554
      %v557 = vmul.f32 %v361, %v555
      %v558 = vmul.f32 %v362, %v554
      %v559 = vmul.f32 %v363, %v555
      %560 = vst [vmem:[%s353] sm:$0xff] %v556
      %561 = vst [vmem:[%s353 + $0x8] sm:$0xff] %v557
      %562 = vst [vmem:[%s353 + $0x10] sm:$0xff] %v558
      %563 = vst [vmem:[%s353 + $0x18] sm:$0xff] %v559
      %s564 = smul.u32 2, %s24
      %p565 = scmp.lt.s32.totalorder %s23, 1
      %s566 = scalar_select %p565, %s23, 1
      %p567 = scmp.lt.s32.totalorder %s564, 1
      %s568 = scalar_select %p567, %s564, 1
      %s569 = smul.addr %s566, 4
      %s570 = sadd.s32 %s568, %s569
      %s571 = smul.addr %s570, 8
      %s572 = scalar_lea.vmem %s7, %s571
      // Predicated region
      $region49: #{attention_block.1} parent=47 // pred_check
        %p573 = pneg %p212
      $region50: #{attention_block.1} parent=47 // pred_check_branch
        %575 = sbr.rel (%p573) target = $region52
      $region51: #{attention_block.1} parent=47 // pred_region
        %s576 = smul.u32 2, %s24
      $region52: #{attention_block.1} parent=47 // pred_fallthru
        _
    $region48: #{attention_block.1} parent=5 // pred_fallthru
      _
    %p577 = scmp.le.s32.totalorder 2, %s14
    // Predicated region
    $region53: #{attention_block.1} parent=5 // pred_check
      %p578 = pneg %p577
    $region54: #{attention_block.1} parent=5 // pred_check_branch
      %580 = sbr.rel (%p578) target = $region56
    $region55: #{attention_block.1} parent=5 // pred_region
      %s581 = ssub.s32 %s14, 2
      // Predicated region
      $region57: #{attention_block.1} parent=55 // pred_check
        %p582 = pneg %p218
      $region58: #{attention_block.1} parent=55 // pred_check_branch
        %584 = sbr.rel (%p582) target = $region60
      $region59: #{attention_block.1} parent=55 // pred_region
        %s585 = smul.u32 2, %s26
        %p586 = scmp.lt.s32.totalorder %s25, 1
        %s587 = scalar_select %p586, %s25, 1
        %p588 = scmp.lt.s32.totalorder %s585, 1
        %s589 = scalar_select %p588, %s585, 1
        %s590 = smul.addr %s587, 4
        %s591 = sadd.s32 %s589, %s590
        %s592 = smul.addr %s591, 8
        %s593 = scalar_lea.vmem %s7, %s592
      $region60: #{attention_block.1} parent=55 // pred_fallthru
        _
    $region56: #{attention_block.1} parent=5 // pred_fallthru
      _
  $region6: #{attention_block.1} parent=0 // loop_footer
    %s18 = sadd.s32 1, %s14
  $region7: #{attention_block.1} parent=0 // loop_footer_branch
    %13 = sbr.rel target = $region3
  $region8: #{attention_block.1} parent=0 // loop_exit
    _

</llo_original>
